<compile_context>
chip_gen: v6e
topology: v6e:2x2x1
jax: 0.10.0
libtpu: 0.0.40
codegen_flags: <defaults>
</compile_context>

<pallas_src>
import functools

import jax
import jax.numpy as jnp
from jax.experimental import pallas as pl
from jax.experimental.pallas import tpu as pltpu


LANE = 128  # TPU lane width: hidden/output feature dims padded to multiples of this


def _round_up(x, m):
    return (x + m - 1) // m * m


def _cdiv(a, b):
    return -(-a // b)


def _act_dtype():
    """bf16 activations (tanh) on chips with bf16 VPU/EUP, fp32 otherwise (v5e/v4)."""
    try:
        kind = jax.devices()[0].device_kind.lower()
    except Exception:  # pragma: no cover - defensive
        return jnp.float32
    if any(tag in kind for tag in ("v6", "v7", "7x")):
        return jnp.bfloat16
    return jnp.float32


def mlp_kernel(x_ref,
               w1, b1, w2, b2, w3, b3, w4, b4, w5, b5,   # hidden: Linear+Tanh x5
               wp, bp,                                    # predict: Linear
               o_ref, *, act_dtype):
    h = x_ref[...]                                        # (TB, n_feature) bf16
    # 5 x (Linear -> Tanh): bf16 MXU matmul, fp32 accumulate + bias, tanh in
    # act_dtype (bf16 on v6e/v7x halves the single-slot EUP work, fp32 on v5e).
    for w_ref, b_ref in ((w1, b1), (w2, b2), (w3, b3), (w4, b4), (w5, b5)):
        acc = jnp.dot(h.astype(jnp.bfloat16), w_ref[...],
                      preferred_element_type=jnp.float32)
        h = jnp.tanh((acc + b_ref[...]).astype(act_dtype))
    # predict Linear in fp32 accumulation + fp32 bias.
    logits = jnp.dot(h.astype(jnp.bfloat16), wp[...],
                     preferred_element_type=jnp.float32) + bp[...]
    # sigmoid(x) = 0.5*tanh(0.5*x) + 0.5 : one EUP op, no fp32 exp overflow.
    o_ref[...] = (0.5 * jnp.tanh(0.5 * logits) + 0.5).astype(o_ref.dtype)


def net_forward(x, params, *, block_b=2048, use_pallas=None):
    """params = list of (w, b) tuples with w: [in,out] fp32, b: [1,out] fp32."""
    B, n_feature = x.shape
    n_hidden = params[0][0].shape[1]
    n_output = params[-1][0].shape[1]

    if use_pallas is None:
        # Small-batch fallback: at tiny B the custom-call fixed cost dominates.
        use_pallas = B > 128
    if not use_pallas:
        return reference_forward(x, params)

    hid_p = _round_up(n_hidden, LANE)
    out_p = _round_up(n_output, LANE)

    # Batch tile: multiple of 16 (bf16 sublane packing).  For large B ensure at
    # least 2 grid steps so the "parallel" axis can shard across v7x's 2 TCs.
    if B >= 256:
        target = _round_up(_cdiv(B, 2), 16)
    else:
        target = _round_up(B, 16)
    tb = _round_up(min(block_b, target), 16)
    b_pad = _round_up(B, tb)

    # Input streamed as bf16, feature dim left unpadded (block dim == full dim).
    x_p = jnp.zeros((b_pad, n_feature), jnp.bfloat16).at[:B].set(
        x.astype(jnp.bfloat16))

    # Pad weights: zero rows/cols + zero bias keep padded activations exactly 0
    # through tanh, so results match the unpadded network on the real columns.
    row_dims = [n_feature] + [hid_p] * 5
    col_dims = [hid_p] * 5 + [out_p]
    flat = []
    layer_dims = []
    for li, (w, b) in enumerate(params):
        din, dout = w.shape
        rp, cp = row_dims[li], col_dims[li]
        w_p = jnp.zeros((rp, cp), jnp.float32).at[:din, :dout].set(w)
        b_p = jnp.zeros((1, cp), jnp.float32).at[:, :dout].set(b)
        flat.extend([w_p.astype(jnp.bfloat16), b_p])      # bf16 weights, fp32 bias
        layer_dims.append((rp, cp))

    grid = (b_pad // tb,)

    in_specs = [pl.BlockSpec((tb, n_feature), lambda i: (i, 0))]          # streamed
    in_specs += [pl.BlockSpec(a.shape, lambda i: (0, 0)) for a in flat]   # resident

    # Advisory cost estimate.
    flops = 2 * b_pad * sum(din * dout for din, dout in layer_dims)
    transcendentals = b_pad * (5 * hid_p + out_p)          # 5 tanh layers + sigmoid
    weight_bytes = sum(int(a.size) * a.dtype.itemsize for a in flat)
    bytes_accessed = int(x_p.size) * 2 + weight_bytes + b_pad * out_p * 4

    # Explicit VMEM budget: double-buffered x/out streams + double-buffered
    # resident constants + a few live activation slabs; >= 32 MiB (v5e default
    # is only 16 MiB), capped at v7x's 64 MiB physical VMEM.
    act_slab = tb * max(hid_p, out_p, n_feature) * 4
    vmem_need = (2 * tb * n_feature * 2 + 2 * tb * out_p * 4
                 + 2 * weight_bytes + 4 * act_slab)
    vmem_limit = max(32 << 20, min(int(vmem_need) + (8 << 20), 64 << 20))

    kernel = functools.partial(mlp_kernel, act_dtype=_act_dtype())

    out = pl.pallas_call(
        kernel,
        out_shape=jax.ShapeDtypeStruct((b_pad, out_p), jnp.float32),
        grid=grid,
        in_specs=in_specs,
        out_specs=pl.BlockSpec((tb, out_p), lambda i: (i, 0)),
        compiler_params=pltpu.CompilerParams(
            dimension_semantics=("parallel",),             # shard batch across TCs
            vmem_limit_bytes=vmem_limit),
        cost_estimate=pl.CostEstimate(
            flops=flops,
            transcendentals=transcendentals,
            bytes_accessed=bytes_accessed),
    )(x_p, *flat)

    return out[:B, :n_output]


def init_params(key, n_feature, n_hidden, n_output):
    """Deterministic init matching the PyTorch module's layer shapes."""
    dims = [(n_feature, n_hidden)] + [(n_hidden, n_hidden)] * 4 + [(n_hidden, n_output)]
    params = []
    for din, dout in dims:
        key, kw, kb = jax.random.split(key, 3)
        bound = 1.0 / jnp.sqrt(din)
        w = jax.random.uniform(kw, (din, dout), jnp.float32, -bound, bound)
        b = jax.random.uniform(kb, (1, dout), jnp.float32, -bound, bound)
        params.append((w, b))
    return params


def reference_forward(x, params):
    h = x
    for w, b in params[:-1]:
        h = jnp.tanh(h @ w + b)
    w, b = params[-1]
    return jax.nn.sigmoid(h @ w + b)


if __name__ == "__main__":
    key = jax.random.PRNGKey(0)
    n_feature, n_hidden, n_output = 16, 32, 8
    batch = 8

    key, kx = jax.random.split(key)
    x = jax.random.normal(kx, (batch, n_feature), jnp.float32)
    params = init_params(key, n_feature, n_hidden, n_output)

    # Small batch, single grid step (force the Pallas path so it is exercised).
    out = jax.block_until_ready(net_forward(x, params, use_pallas=True))
    ref = reference_forward(x, params)
    assert out.shape == (batch, n_output)
    # bf16 matmuls (and bf16 tanh on v6e/v7x) => compare loosely vs fp32 ref.
    assert jnp.allclose(out, ref, atol=2e-2, rtol=2e-2), float(jnp.max(jnp.abs(out - ref)))

    # Non-multiple batch + multi-step grid (exercises padding and pipelining).
    x2 = jax.random.normal(jax.random.PRNGKey(1), (300, n_feature), jnp.float32)
    out2 = jax.block_until_ready(
        net_forward(x2, params, block_b=128, use_pallas=True))
    ref2 = reference_forward(x2, params)
    assert out2.shape == (300, n_output)
    assert jnp.allclose(out2, ref2, atol=2e-2, rtol=2e-2), float(jnp.max(jnp.abs(out2 - ref2)))

    print("KERNEL_OK")
</pallas_src>

<mosaic_0001>
module attributes {stable_mosaic.version = 11 : i64} {
  func.func @mlp_kernel(%arg0: i32, %arg1: memref<16x16xbf16, #tpu.memory_space<vmem>>, %arg2: memref<16x128xbf16, #tpu.memory_space<vmem>>, %arg3: memref<1x128xf32, #tpu.memory_space<vmem>>, %arg4: memref<128x128xbf16, #tpu.memory_space<vmem>>, %arg5: memref<1x128xf32, #tpu.memory_space<vmem>>, %arg6: memref<128x128xbf16, #tpu.memory_space<vmem>>, %arg7: memref<1x128xf32, #tpu.memory_space<vmem>>, %arg8: memref<128x128xbf16, #tpu.memory_space<vmem>>, %arg9: memref<1x128xf32, #tpu.memory_space<vmem>>, %arg10: memref<128x128xbf16, #tpu.memory_space<vmem>>, %arg11: memref<1x128xf32, #tpu.memory_space<vmem>>, %arg12: memref<128x128xbf16, #tpu.memory_space<vmem>>, %arg13: memref<1x128xf32, #tpu.memory_space<vmem>>, %arg14: memref<16x128xf32, #tpu.memory_space<vmem>>) attributes {dimension_semantics = [#tpu.dimension_semantics<parallel>], iteration_bounds = array<i64: 1>, scalar_prefetch = 0 : i64, scratch_operands = 0 : i64, tpu.core_type = #tpu.core_type<tc>, window_params = [{transform_indices = @transform_0, window_bounds = array<i64: 16, 16>}, {pipeline_mode = #tpu.pipeline_mode<synchronous>, transform_indices = @transform_1, window_bounds = array<i64: 16, 128>}, {pipeline_mode = #tpu.pipeline_mode<synchronous>, transform_indices = @transform_2, window_bounds = array<i64: 1, 128>}, {pipeline_mode = #tpu.pipeline_mode<synchronous>, transform_indices = @transform_3, window_bounds = array<i64: 128, 128>}, {pipeline_mode = #tpu.pipeline_mode<synchronous>, transform_indices = @transform_4, window_bounds = array<i64: 1, 128>}, {pipeline_mode = #tpu.pipeline_mode<synchronous>, transform_indices = @transform_5, window_bounds = array<i64: 128, 128>}, {pipeline_mode = #tpu.pipeline_mode<synchronous>, transform_indices = @transform_6, window_bounds = array<i64: 1, 128>}, {pipeline_mode = #tpu.pipeline_mode<synchronous>, transform_indices = @transform_7, window_bounds = array<i64: 128, 128>}, {pipeline_mode = #tpu.pipeline_mode<synchronous>, transform_indices = @transform_8, window_bounds = array<i64: 1, 128>}, {pipeline_mode = #tpu.pipeline_mode<synchronous>, transform_indices = @transform_9, window_bounds = array<i64: 128, 128>}, {pipeline_mode = #tpu.pipeline_mode<synchronous>, transform_indices = @transform_10, window_bounds = array<i64: 1, 128>}, {pipeline_mode = #tpu.pipeline_mode<synchronous>, transform_indices = @transform_11, window_bounds = array<i64: 128, 128>}, {pipeline_mode = #tpu.pipeline_mode<synchronous>, transform_indices = @transform_12, window_bounds = array<i64: 1, 128>}, {transform_indices = @transform_13, window_bounds = array<i64: 16, 128>}]} {
    %c0 = arith.constant 0 : index
    %c0_0 = arith.constant 0 : index
    %0 = vector.load %arg1[%c0, %c0_0] : memref<16x16xbf16, #tpu.memory_space<vmem>>, vector<16x16xbf16>
    %c0_1 = arith.constant 0 : index
    %c0_2 = arith.constant 0 : index
    %1 = vector.load %arg2[%c0_1, %c0_2] : memref<16x128xbf16, #tpu.memory_space<vmem>>, vector<16x128xbf16>
    %cst = arith.constant dense<0.000000e+00> : vector<16x128xf32>
    %2 = tpu.matmul %0, %1, %cst {dimension_numbers = #tpu.dot_dimension_numbers<[1], [0], [0], [1], [0, 0, 1, 1], [], []>} : vector<16x16xbf16>, vector<16x128xbf16>, vector<16x128xf32> -> vector<16x128xf32>
    %c0_3 = arith.constant 0 : index
    %c0_4 = arith.constant 0 : index
    %3 = vector.load %arg3[%c0_3, %c0_4] : memref<1x128xf32, #tpu.memory_space<vmem>>, vector<1x128xf32>
    %4 = vector.broadcast %3 : vector<1x128xf32> to vector<16x128xf32>
    %5 = arith.addf %2, %4 : vector<16x128xf32>
    %6 = math.tanh %5 : vector<16x128xf32>
    %7 = arith.truncf %6 : vector<16x128xf32> to vector<16x128xbf16>
    %c0_5 = arith.constant 0 : index
    %c0_6 = arith.constant 0 : index
    %8 = vector.load %arg4[%c0_5, %c0_6] : memref<128x128xbf16, #tpu.memory_space<vmem>>, vector<128x128xbf16>
    %cst_7 = arith.constant dense<0.000000e+00> : vector<16x128xf32>
    %9 = tpu.matmul %7, %8, %cst_7 {dimension_numbers = #tpu.dot_dimension_numbers<[1], [0], [0], [1], [0, 0, 1, 1], [], []>} : vector<16x128xbf16>, vector<128x128xbf16>, vector<16x128xf32> -> vector<16x128xf32>
    %c0_8 = arith.constant 0 : index
    %c0_9 = arith.constant 0 : index
    %10 = vector.load %arg5[%c0_8, %c0_9] : memref<1x128xf32, #tpu.memory_space<vmem>>, vector<1x128xf32>
    %11 = vector.broadcast %10 : vector<1x128xf32> to vector<16x128xf32>
    %12 = arith.addf %9, %11 : vector<16x128xf32>
    %13 = math.tanh %12 : vector<16x128xf32>
    %14 = arith.truncf %13 : vector<16x128xf32> to vector<16x128xbf16>
    %c0_10 = arith.constant 0 : index
    %c0_11 = arith.constant 0 : index
    %15 = vector.load %arg6[%c0_10, %c0_11] : memref<128x128xbf16, #tpu.memory_space<vmem>>, vector<128x128xbf16>
    %cst_12 = arith.constant dense<0.000000e+00> : vector<16x128xf32>
    %16 = tpu.matmul %14, %15, %cst_12 {dimension_numbers = #tpu.dot_dimension_numbers<[1], [0], [0], [1], [0, 0, 1, 1], [], []>} : vector<16x128xbf16>, vector<128x128xbf16>, vector<16x128xf32> -> vector<16x128xf32>
    %c0_13 = arith.constant 0 : index
    %c0_14 = arith.constant 0 : index
    %17 = vector.load %arg7[%c0_13, %c0_14] : memref<1x128xf32, #tpu.memory_space<vmem>>, vector<1x128xf32>
    %18 = vector.broadcast %17 : vector<1x128xf32> to vector<16x128xf32>
    %19 = arith.addf %16, %18 : vector<16x128xf32>
    %20 = math.tanh %19 : vector<16x128xf32>
    %21 = arith.truncf %20 : vector<16x128xf32> to vector<16x128xbf16>
    %c0_15 = arith.constant 0 : index
    %c0_16 = arith.constant 0 : index
    %22 = vector.load %arg8[%c0_15, %c0_16] : memref<128x128xbf16, #tpu.memory_space<vmem>>, vector<128x128xbf16>
    %cst_17 = arith.constant dense<0.000000e+00> : vector<16x128xf32>
    %23 = tpu.matmul %21, %22, %cst_17 {dimension_numbers = #tpu.dot_dimension_numbers<[1], [0], [0], [1], [0, 0, 1, 1], [], []>} : vector<16x128xbf16>, vector<128x128xbf16>, vector<16x128xf32> -> vector<16x128xf32>
    %c0_18 = arith.constant 0 : index
    %c0_19 = arith.constant 0 : index
    %24 = vector.load %arg9[%c0_18, %c0_19] : memref<1x128xf32, #tpu.memory_space<vmem>>, vector<1x128xf32>
    %25 = vector.broadcast %24 : vector<1x128xf32> to vector<16x128xf32>
    %26 = arith.addf %23, %25 : vector<16x128xf32>
    %27 = math.tanh %26 : vector<16x128xf32>
    %28 = arith.truncf %27 : vector<16x128xf32> to vector<16x128xbf16>
    %c0_20 = arith.constant 0 : index
    %c0_21 = arith.constant 0 : index
    %29 = vector.load %arg10[%c0_20, %c0_21] : memref<128x128xbf16, #tpu.memory_space<vmem>>, vector<128x128xbf16>
    %cst_22 = arith.constant dense<0.000000e+00> : vector<16x128xf32>
    %30 = tpu.matmul %28, %29, %cst_22 {dimension_numbers = #tpu.dot_dimension_numbers<[1], [0], [0], [1], [0, 0, 1, 1], [], []>} : vector<16x128xbf16>, vector<128x128xbf16>, vector<16x128xf32> -> vector<16x128xf32>
    %c0_23 = arith.constant 0 : index
    %c0_24 = arith.constant 0 : index
    %31 = vector.load %arg11[%c0_23, %c0_24] : memref<1x128xf32, #tpu.memory_space<vmem>>, vector<1x128xf32>
    %32 = vector.broadcast %31 : vector<1x128xf32> to vector<16x128xf32>
    %33 = arith.addf %30, %32 : vector<16x128xf32>
    %34 = math.tanh %33 : vector<16x128xf32>
    %35 = arith.truncf %34 : vector<16x128xf32> to vector<16x128xbf16>
    %c0_25 = arith.constant 0 : index
    %c0_26 = arith.constant 0 : index
    %36 = vector.load %arg12[%c0_25, %c0_26] : memref<128x128xbf16, #tpu.memory_space<vmem>>, vector<128x128xbf16>
    %cst_27 = arith.constant dense<0.000000e+00> : vector<16x128xf32>
    %37 = tpu.matmul %35, %36, %cst_27 {dimension_numbers = #tpu.dot_dimension_numbers<[1], [0], [0], [1], [0, 0, 1, 1], [], []>} : vector<16x128xbf16>, vector<128x128xbf16>, vector<16x128xf32> -> vector<16x128xf32>
    %c0_28 = arith.constant 0 : index
    %c0_29 = arith.constant 0 : index
    %38 = vector.load %arg13[%c0_28, %c0_29] : memref<1x128xf32, #tpu.memory_space<vmem>>, vector<1x128xf32>
    %39 = vector.broadcast %38 : vector<1x128xf32> to vector<16x128xf32>
    %40 = arith.addf %37, %39 : vector<16x128xf32>
    %cst_30 = arith.constant 5.000000e-01 : f32
    %41 = vector.broadcast %cst_30 : f32 to vector<16x128xf32>
    %42 = arith.mulf %41, %40 : vector<16x128xf32>
    %43 = math.tanh %42 : vector<16x128xf32>
    %cst_31 = arith.constant 5.000000e-01 : f32
    %44 = vector.broadcast %cst_31 : f32 to vector<16x128xf32>
    %45 = arith.mulf %44, %43 : vector<16x128xf32>
    %cst_32 = arith.constant 5.000000e-01 : f32
    %46 = vector.broadcast %cst_32 : f32 to vector<16x128xf32>
    %47 = arith.addf %45, %46 : vector<16x128xf32>
    %c0_33 = arith.constant 0 : index
    %c0_34 = arith.constant 0 : index
    %48 = vector.load %arg14[%c0_33, %c0_34] : memref<16x128xf32, #tpu.memory_space<vmem>>, vector<16x128xf32>
    tpu.vector_store %arg14[%c0_33, %c0_34], %47 {strides = array<i32>} : memref<16x128xf32, #tpu.memory_space<vmem>>, vector<16x128xf32>,
    return
  }
  func.func @transform_0(%arg0: i32) -> (i32, i32) {
    %c0_i32 = arith.constant 0 : i32
    %c0_i32_0 = arith.constant 0 : i32
    return %arg0, %c0_i32 : i32, i32
  }
  func.func @transform_1(%arg0: i32) -> (i32, i32) {
    %c0_i32 = arith.constant 0 : i32
    %c0_i32_0 = arith.constant 0 : i32
    %c0_i32_1 = arith.constant 0 : i32
    return %c0_i32, %c0_i32_0 : i32, i32
  }
  func.func @transform_2(%arg0: i32) -> (i32, i32) {
    %c0_i32 = arith.constant 0 : i32
    %c0_i32_0 = arith.constant 0 : i32
    %c0_i32_1 = arith.constant 0 : i32
    return %c0_i32, %c0_i32_0 : i32, i32
  }
  func.func @transform_3(%arg0: i32) -> (i32, i32) {
    %c0_i32 = arith.constant 0 : i32
    %c0_i32_0 = arith.constant 0 : i32
    %c0_i32_1 = arith.constant 0 : i32
    return %c0_i32, %c0_i32_0 : i32, i32
  }
  func.func @transform_4(%arg0: i32) -> (i32, i32) {
    %c0_i32 = arith.constant 0 : i32
    %c0_i32_0 = arith.constant 0 : i32
    %c0_i32_1 = arith.constant 0 : i32
    return %c0_i32, %c0_i32_0 : i32, i32
  }
  func.func @transform_5(%arg0: i32) -> (i32, i32) {
    %c0_i32 = arith.constant 0 : i32
    %c0_i32_0 = arith.constant 0 : i32
    %c0_i32_1 = arith.constant 0 : i32
    return %c0_i32, %c0_i32_0 : i32, i32
  }
  func.func @transform_6(%arg0: i32) -> (i32, i32) {
    %c0_i32 = arith.constant 0 : i32
    %c0_i32_0 = arith.constant 0 : i32
    %c0_i32_1 = arith.constant 0 : i32
    return %c0_i32, %c0_i32_0 : i32, i32
  }
  func.func @transform_7(%arg0: i32) -> (i32, i32) {
    %c0_i32 = arith.constant 0 : i32
    %c0_i32_0 = arith.constant 0 : i32
    %c0_i32_1 = arith.constant 0 : i32
    return %c0_i32, %c0_i32_0 : i32, i32
  }
  func.func @transform_8(%arg0: i32) -> (i32, i32) {
    %c0_i32 = arith.constant 0 : i32
    %c0_i32_0 = arith.constant 0 : i32
    %c0_i32_1 = arith.constant 0 : i32
    return %c0_i32, %c0_i32_0 : i32, i32
  }
  func.func @transform_9(%arg0: i32) -> (i32, i32) {
    %c0_i32 = arith.constant 0 : i32
    %c0_i32_0 = arith.constant 0 : i32
    %c0_i32_1 = arith.constant 0 : i32
    return %c0_i32, %c0_i32_0 : i32, i32
  }
  func.func @transform_10(%arg0: i32) -> (i32, i32) {
    %c0_i32 = arith.constant 0 : i32
    %c0_i32_0 = arith.constant 0 : i32
    %c0_i32_1 = arith.constant 0 : i32
    return %c0_i32, %c0_i32_0 : i32, i32
  }
  func.func @transform_11(%arg0: i32) -> (i32, i32) {
    %c0_i32 = arith.constant 0 : i32
    %c0_i32_0 = arith.constant 0 : i32
    %c0_i32_1 = arith.constant 0 : i32
    return %c0_i32, %c0_i32_0 : i32, i32
  }
  func.func @transform_12(%arg0: i32) -> (i32, i32) {
    %c0_i32 = arith.constant 0 : i32
    %c0_i32_0 = arith.constant 0 : i32
    %c0_i32_1 = arith.constant 0 : i32
    return %c0_i32, %c0_i32_0 : i32, i32
  }
  func.func @transform_13(%arg0: i32) -> (i32, i32) {
    %c0_i32 = arith.constant 0 : i32
    %c0_i32_0 = arith.constant 0 : i32
    return %arg0, %c0_i32 : i32, i32
  }
}

</mosaic_0001>

<llo_original>
// kernel: tpu_custom_call.1
$region0: #{tpu_custom_call.1}
  #allocation0 [shape = 'u32[]', space=smem, size = 0x4, offset = 0x4, fixed_abs, tag = 'smem constant byte address 0x4 - core index']
  #allocation1 [shape = 'u32[144,128]{1,0:T(1,128)}', space=vmem, size = 0x12000, scoped, tag = 'internal scratch']
  %s0 = inlined_call_operand.hbm [shape: bf16[16,16], index: 0, kind: input, shape index: {}]
  %s1 = inlined_call_operand.hbm [shape: bf16[16,128], index: 1, kind: input, shape index: {}]
  %s2 = inlined_call_operand.vmem [shape: f32[1,128], index: 2, kind: input, shape index: {}]
  %s3 = inlined_call_operand.hbm [shape: bf16[128,128], index: 3, kind: input, shape index: {}]
  %s4 = inlined_call_operand.vmem [shape: f32[1,128], index: 4, kind: input, shape index: {}]
  %s5 = inlined_call_operand.hbm [shape: bf16[128,128], index: 5, kind: input, shape index: {}]
  %s6 = inlined_call_operand.vmem [shape: f32[1,128], index: 6, kind: input, shape index: {}]
  %s7 = inlined_call_operand.hbm [shape: bf16[128,128], index: 7, kind: input, shape index: {}]
  %s8 = inlined_call_operand.vmem [shape: f32[1,128], index: 8, kind: input, shape index: {}]
  %s9 = inlined_call_operand.hbm [shape: bf16[128,128], index: 9, kind: input, shape index: {}]
  %s10 = inlined_call_operand.vmem [shape: f32[1,128], index: 10, kind: input, shape index: {}]
  %s11 = inlined_call_operand.hbm [shape: bf16[128,128], index: 11, kind: input, shape index: {}]
  %s12 = inlined_call_operand.vmem [shape: f32[1,128], index: 12, kind: input, shape index: {}]
  %s13 = inlined_call_operand.hbm [shape: f32[16,128], index: 13, kind: output, shape index: {}]
  %s14 = sld [smem:[#allocation0]]
  $region90: #{tpu_custom_call.1} parent=0
    _
  %s16 = ssub.s32 1, %s14
  %s17 = scalar_select 0, %s16, %s14
  $region1: #{tpu_custom_call.1} parent=0
    #allocation2 [shape = 'u8[4096]{0}', space=vmem, size = 0x1000, scoped, tag = 'input window, operand 0, single buffered']
    #allocation3 [shape = 's32[1]{0}', space=sflag, size = 0x4, scoped, tag = 'scoped memory for tpu_custom_call.1']
    #allocation4 [shape = 's32[1]{0}', space=sflag, size = 0x4, scoped, tag = 'scoped memory for tpu_custom_call.1']
    #allocation5 [shape = 'u8[4096]{0}', space=vmem, size = 0x1000, scoped, tag = 'input window, operand 1, single buffered']
    #allocation6 [shape = 's32[1]{0}', space=sflag, size = 0x4, scoped, tag = 'scoped memory for tpu_custom_call.1']
    #allocation7 [shape = 'u8[32768]{0}', space=vmem, size = 0x8000, scoped, tag = 'input window, operand 3, single buffered']
    #allocation8 [shape = 'u8[32768]{0}', space=vmem, size = 0x8000, scoped, tag = 'input window, operand 5, single buffered']
    #allocation9 [shape = 's32[1]{0}', space=sflag, size = 0x4, scoped, tag = 'scoped memory for tpu_custom_call.1']
    #allocation10 [shape = 'u8[32768]{0}', space=vmem, size = 0x8000, scoped, tag = 'input window, operand 7, single buffered']
    #allocation11 [shape = 'u8[32768]{0}', space=vmem, size = 0x8000, scoped, tag = 'input window, operand 9, single buffered']
    #allocation12 [shape = 's32[1]{0}', space=sflag, size = 0x4, scoped, tag = 'scoped memory for tpu_custom_call.1']
    #allocation13 [shape = 'u8[32768]{0}', space=vmem, size = 0x8000, scoped, tag = 'input window, operand 11, single buffered']
    #allocation14 [shape = 'u8[8192]{0}', space=vmem, size = 0x2000, scoped, tag = 'output window, operand 0, single buffered']
    %18 = vsyncpa [#allocation3], 0
    %19 = vsyncpa [#allocation6], 0
    %20 = vsyncpa [#allocation9], 0
    %21 = vsyncpa [#allocation12], 0
    %22 = vsyncpa [#allocation4], 0
    // Predicated region
    $region2: #{tpu_custom_call.1} parent=1 // pred_check
      _
    $region3: #{tpu_custom_call.1} parent=1 // pred_check_branch
      %24 = sbr.rel (0) target = $region5
    $region4: #{tpu_custom_call.1} parent=1 // pred_region
      %s26 = ssub.s32 128, 128
      %27 = vsyncadd [#allocation3], %s26
      %s28 = sshll.u32 [#allocation2], 4
      %s29 = int_to_ptr.vmem [resolvable:$true] %s28
      %34 = dma.hbm_to_vmem [thread:$0]  %s0, 128, %s29, [#allocation3], 64, 64, 4
    $region5: #{tpu_custom_call.1} parent=1 // pred_fallthru
      _
    // Predicated region
    $region6: #{tpu_custom_call.1} parent=1 // pred_check
      _
    $region7: #{tpu_custom_call.1} parent=1 // pred_check_branch
      %36 = sbr.rel (0) target = $region9
    $region8: #{tpu_custom_call.1} parent=1 // pred_region
      %s38 = ssub.s32 128, 128
      %39 = vsyncadd [#allocation6], %s38
      %s40 = sshll.u32 [#allocation5], 4
      %s41 = int_to_ptr.vmem [resolvable:$true] %s40
      %46 = dma.hbm_to_vmem [thread:$0]  %s1, 128, %s41, [#allocation6], 64, 64, 4
    $region9: #{tpu_custom_call.1} parent=1 // pred_fallthru
      _
    // Predicated region
    $region10: #{tpu_custom_call.1} parent=1 // pred_check
      _
    $region11: #{tpu_custom_call.1} parent=1 // pred_check_branch
      %48 = sbr.rel (0) target = $region13
    $region12: #{tpu_custom_call.1} parent=1 // pred_region
      _
    $region13: #{tpu_custom_call.1} parent=1 // pred_fallthru
      _
    // Predicated region
    $region14: #{tpu_custom_call.1} parent=1 // pred_check
      _
    $region15: #{tpu_custom_call.1} parent=1 // pred_check_branch
      %50 = sbr.rel (0) target = $region17
    $region16: #{tpu_custom_call.1} parent=1 // pred_region
      %s52 = ssub.s32 1024, 1024
      %53 = vsyncadd [#allocation6], %s52
      %s54 = sshll.u32 [#allocation7], 4
      %s55 = int_to_ptr.vmem [resolvable:$true] %s54
      %60 = dma.hbm_to_vmem [thread:$0]  %s3, 1024, %s55, [#allocation6], 64, 64, 4
    $region17: #{tpu_custom_call.1} parent=1 // pred_fallthru
      _
    // Predicated region
    $region18: #{tpu_custom_call.1} parent=1 // pred_check
      _
    $region19: #{tpu_custom_call.1} parent=1 // pred_check_branch
      %62 = sbr.rel (0) target = $region21
    $region20: #{tpu_custom_call.1} parent=1 // pred_region
      _
    $region21: #{tpu_custom_call.1} parent=1 // pred_fallthru
      _
    // Predicated region
    $region22: #{tpu_custom_call.1} parent=1 // pred_check
      _
    $region23: #{tpu_custom_call.1} parent=1 // pred_check_branch
      %64 = sbr.rel (0) target = $region25
    $region24: #{tpu_custom_call.1} parent=1 // pred_region
      %s66 = ssub.s32 1024, 1024
      %67 = vsyncadd [#allocation9], %s66
      %s68 = sshll.u32 [#allocation8], 4
      %s69 = int_to_ptr.vmem [resolvable:$true] %s68
      %74 = dma.hbm_to_vmem [thread:$0]  %s5, 1024, %s69, [#allocation9], 64, 64, 4
    $region25: #{tpu_custom_call.1} parent=1 // pred_fallthru
      _
    // Predicated region
    $region26: #{tpu_custom_call.1} parent=1 // pred_check
      _
    $region27: #{tpu_custom_call.1} parent=1 // pred_check_branch
      %76 = sbr.rel (0) target = $region29
    $region28: #{tpu_custom_call.1} parent=1 // pred_region
      _
    $region29: #{tpu_custom_call.1} parent=1 // pred_fallthru
      _
    // Predicated region
    $region30: #{tpu_custom_call.1} parent=1 // pred_check
      _
    $region31: #{tpu_custom_call.1} parent=1 // pred_check_branch
      %78 = sbr.rel (0) target = $region33
    $region32: #{tpu_custom_call.1} parent=1 // pred_region
      %s80 = ssub.s32 1024, 1024
      %81 = vsyncadd [#allocation9], %s80
      %s82 = sshll.u32 [#allocation10], 4
      %s83 = int_to_ptr.vmem [resolvable:$true] %s82
      %88 = dma.hbm_to_vmem [thread:$0]  %s7, 1024, %s83, [#allocation9], 64, 64, 4
    $region33: #{tpu_custom_call.1} parent=1 // pred_fallthru
      _
    // Predicated region
    $region34: #{tpu_custom_call.1} parent=1 // pred_check
      _
    $region35: #{tpu_custom_call.1} parent=1 // pred_check_branch
      %90 = sbr.rel (0) target = $region37
    $region36: #{tpu_custom_call.1} parent=1 // pred_region
      _
    $region37: #{tpu_custom_call.1} parent=1 // pred_fallthru
      _
    // Predicated region
    $region38: #{tpu_custom_call.1} parent=1 // pred_check
      _
    $region39: #{tpu_custom_call.1} parent=1 // pred_check_branch
      %92 = sbr.rel (0) target = $region41
    $region40: #{tpu_custom_call.1} parent=1 // pred_region
      %s94 = ssub.s32 1024, 1024
      %95 = vsyncadd [#allocation12], %s94
      %s96 = sshll.u32 [#allocation11], 4
      %s97 = int_to_ptr.vmem [resolvable:$true] %s96
      %102 = dma.hbm_to_vmem [thread:$0]  %s9, 1024, %s97, [#allocation12], 64, 64, 4
    $region41: #{tpu_custom_call.1} parent=1 // pred_fallthru
      _
    // Predicated region
    $region42: #{tpu_custom_call.1} parent=1 // pred_check
      _
    $region43: #{tpu_custom_call.1} parent=1 // pred_check_branch
      %104 = sbr.rel (0) target = $region45
    $region44: #{tpu_custom_call.1} parent=1 // pred_region
      _
    $region45: #{tpu_custom_call.1} parent=1 // pred_fallthru
      _
    // Predicated region
    $region46: #{tpu_custom_call.1} parent=1 // pred_check
      _
    $region47: #{tpu_custom_call.1} parent=1 // pred_check_branch
      %106 = sbr.rel (0) target = $region49
    $region48: #{tpu_custom_call.1} parent=1 // pred_region
      %s108 = ssub.s32 1024, 1024
      %109 = vsyncadd [#allocation12], %s108
      %s110 = sshll.u32 [#allocation13], 4
      %s111 = int_to_ptr.vmem [resolvable:$true] %s110
      %116 = dma.hbm_to_vmem [thread:$0]  %s11, 1024, %s111, [#allocation12], 64, 64, 4
    $region49: #{tpu_custom_call.1} parent=1 // pred_fallthru
      _
    // Predicated region
    $region50: #{tpu_custom_call.1} parent=1 // pred_check
      _
    $region51: #{tpu_custom_call.1} parent=1 // pred_check_branch
      %118 = sbr.rel (0) target = $region53
    $region52: #{tpu_custom_call.1} parent=1 // pred_region
      _
    $region53: #{tpu_custom_call.1} parent=1 // pred_fallthru
      _
    // Predicated region
    $region54: #{tpu_custom_call.1} parent=1 // pred_check
      _
    $region55: #{tpu_custom_call.1} parent=1 // pred_check_branch
      %120 = sbr.rel (0) target = $region57
    $region56: #{tpu_custom_call.1} parent=1 // pred_region
      %121 = dma.done [#allocation3], 128
    $region57: #{tpu_custom_call.1} parent=1 // pred_fallthru
      _
    // Predicated region
    $region58: #{tpu_custom_call.1} parent=1 // pred_check
      _
    $region59: #{tpu_custom_call.1} parent=1 // pred_check_branch
      %123 = sbr.rel (0) target = $region61
    $region60: #{tpu_custom_call.1} parent=1 // pred_region
      %124 = dma.done [#allocation6], 128
    $region61: #{tpu_custom_call.1} parent=1 // pred_fallthru
      _
    // Predicated region
    $region62: #{tpu_custom_call.1} parent=1 // pred_check
      _
    $region63: #{tpu_custom_call.1} parent=1 // pred_check_branch
      %126 = sbr.rel (0) target = $region65
    $region64: #{tpu_custom_call.1} parent=1 // pred_region
      %127 = dma.done [#allocation6], 1024
    $region65: #{tpu_custom_call.1} parent=1 // pred_fallthru
      _
    // Predicated region
    $region66: #{tpu_custom_call.1} parent=1 // pred_check
      _
    $region67: #{tpu_custom_call.1} parent=1 // pred_check_branch
      %129 = sbr.rel (0) target = $region69
    $region68: #{tpu_custom_call.1} parent=1 // pred_region
      %130 = dma.done [#allocation9], 1024
    $region69: #{tpu_custom_call.1} parent=1 // pred_fallthru
      _
    // Predicated region
    $region70: #{tpu_custom_call.1} parent=1 // pred_check
      _
    $region71: #{tpu_custom_call.1} parent=1 // pred_check_branch
      %132 = sbr.rel (0) target = $region73
    $region72: #{tpu_custom_call.1} parent=1 // pred_region
      %133 = dma.done [#allocation9], 1024
    $region73: #{tpu_custom_call.1} parent=1 // pred_fallthru
      _
    // Predicated region
    $region74: #{tpu_custom_call.1} parent=1 // pred_check
      _
    $region75: #{tpu_custom_call.1} parent=1 // pred_check_branch
      %135 = sbr.rel (0) target = $region77
    $region76: #{tpu_custom_call.1} parent=1 // pred_region
      %136 = dma.done [#allocation12], 1024
    $region77: #{tpu_custom_call.1} parent=1 // pred_fallthru
      _
    // Predicated region
    $region78: #{tpu_custom_call.1} parent=1 // pred_check
      _
    $region79: #{tpu_custom_call.1} parent=1 // pred_check_branch
      %138 = sbr.rel (0) target = $region81
    $region80: #{tpu_custom_call.1} parent=1 // pred_region
      %139 = dma.done [#allocation12], 1024
    $region81: #{tpu_custom_call.1} parent=1 // pred_fallthru
      _
    %v141 = vld [vmem:[#allocation2] sm:$0xf]
    %v142 = vld [vmem:[#allocation2 + $0x4] sm:$0xf]
    %v143 = vld [vmem:[#allocation5] sm:$0xf]
    %v144 = vld [vmem:[#allocation5 + $0x4] sm:$0xf]
    %v145 = vld [vmem:[%s2] sm:$0x1]
    %v147 = vlaneseq
    %v148 = vshrl.u32 %v147, 7
    %v149 = vsub.s32 0, %v148
    %v150 = vrot.slane %v145, %v149
    %v154 = vunpack.c.l.b16 %v141
    %v155 = vunpack.c.l.b16 %v142
    %v156 = vpack.c.b16 %v155, %v154
    %v159 = vunpack.c.l.b16 %v143
    %v160 = vunpack.c.l.b16 %v144
    %v161 = vpack.c.b16 %v160, %v159
    %vm163 = vcmask 130048
    %v165 = vsel %vm163, %v156, 0
    %167 = vmatprep.subr.bf16.mxu0 0
    %168 = vmatpush1.bf16.msra.mxu0 0
    %169 = vmatprep.subr.bf16.mxu0 0
    %170 = vmatpush1.bf16.msra.mxu0 0
    %171 = vmatprep.subr.bf16.mxu0 0
    %172 = vmatpush1.bf16.msra.mxu0 0
    %173 = vmatprep.subr.bf16.mxu0 0
    %174 = vmatpush1.bf16.msra.mxu0 0
    %175 = vmatprep.subr.bf16.mxu0 0
    %176 = vmatpush1.bf16.msra.mxu0 0
    %177 = vmatprep.subr.bf16.mxu0 0
    %178 = vmatpush1.bf16.msra.mxu0 0
    %179 = vmatprep.subr.bf16.mxu0 0
    %180 = vmatpush1.bf16.msra.mxu0 0
    %181 = vmatprep.subr.bf16.mxu0 0
    %182 = vmatpush1.bf16.msra.mxu0 %v161
    %183 = vmatprep.subr.bf16.mxu0 0
    %184 = vmatpush2.bf16.msra.mxu0 0
    %185 = vmatprep.subr.bf16.mxu0 0
    %186 = vmatpush2.bf16.msra.mxu0 0
    %187 = vmatprep.subr.bf16.mxu0 0
    %188 = vmatpush2.bf16.msra.mxu0 0
    %189 = vmatprep.subr.bf16.mxu0 0
    %190 = vmatpush2.bf16.msra.mxu0 0
    %191 = vmatprep.subr.bf16.mxu0 0
    %192 = vmatpush2.bf16.msra.mxu0 0
    %193 = vmatprep.subr.bf16.mxu0 0
    %194 = vmatpush2.bf16.msra.mxu0 0
    %195 = vmatprep.subr.bf16.mxu0 0
    %196 = vmatpush2.bf16.msra.mxu0 0
    %197 = vmatprep.subr.bf16.mxu0 0
    %198 = vmatpush2.bf16.msra.mxu0 0
    %199 = vmatprep.mubr.bf16.mxu0 0
    %200 = vmatmul.mubr.bf16.gmra.mxu0 %v165
    %v201 = vpop.f32.mrf.mxu0
    %v202 = vadd.f32 %v150, %v201
    %v203 = vpop.f32.mrf.mxu0
    %v204 = vpop.f32.mrf.mxu0
    %v205 = vadd.f32 %v150, %v204
    %v206 = vpop.f32.mrf.mxu0
    %207 = vdwg.mxu0
    %v208 = vtanh.pop %v202
    %v209 = vtanh.pop %v205
    %v210 = vpack.c.bf16 %v209, %v208
    %v211 = vld [vmem:[#allocation7] sm:$0xf]
    %v212 = vld [vmem:[#allocation7 + $0x4] sm:$0xf]
    %v213 = vld [vmem:[#allocation7 + $0x8] sm:$0xf]
    %v214 = vld [vmem:[#allocation7 + $0xc] sm:$0xf]
    %v215 = vld [vmem:[#allocation7 + $0x10] sm:$0xf]
    %v216 = vld [vmem:[#allocation7 + $0x14] sm:$0xf]
    %v217 = vld [vmem:[#allocation7 + $0x18] sm:$0xf]
    %v218 = vld [vmem:[#allocation7 + $0x1c] sm:$0xf]
    %v219 = vld [vmem:[#allocation7 + $0x20] sm:$0xf]
    %v220 = vld [vmem:[#allocation7 + $0x24] sm:$0xf]
    %v221 = vld [vmem:[#allocation7 + $0x28] sm:$0xf]
    %v222 = vld [vmem:[#allocation7 + $0x2c] sm:$0xf]
    %v223 = vld [vmem:[#allocation7 + $0x30] sm:$0xf]
    %v224 = vld [vmem:[#allocation7 + $0x34] sm:$0xf]
    %v225 = vld [vmem:[#allocation7 + $0x38] sm:$0xf]
    %v226 = vld [vmem:[#allocation7 + $0x3c] sm:$0xf]
    %v227 = vld [vmem:[%s4] sm:$0x1]
    %v229 = vlaneseq
    %v230 = vshrl.u32 %v229, 7
    %v231 = vsub.s32 0, %v230
    %v232 = vrot.slane %v227, %v231
    %v250 = vunpack.c.l.b16 %v211
    %v251 = vunpack.c.l.b16 %v212
    %v252 = vunpack.c.l.b16 %v213
    %v253 = vunpack.c.l.b16 %v214
    %v254 = vunpack.c.l.b16 %v215
    %v255 = vunpack.c.l.b16 %v216
    %v256 = vunpack.c.l.b16 %v217
    %v257 = vunpack.c.l.b16 %v218
    %v258 = vunpack.c.l.b16 %v219
    %v259 = vunpack.c.l.b16 %v220
    %v260 = vunpack.c.l.b16 %v221
    %v261 = vunpack.c.l.b16 %v222
    %v262 = vunpack.c.l.b16 %v223
    %v263 = vunpack.c.l.b16 %v224
    %v264 = vunpack.c.l.b16 %v225
    %v265 = vunpack.c.l.b16 %v226
    %v266 = vpack.c.b16 %v251, %v250
    %v267 = vpack.c.b16 %v253, %v252
    %v268 = vpack.c.b16 %v255, %v254
    %v269 = vpack.c.b16 %v257, %v256
    %v270 = vpack.c.b16 %v259, %v258
    %v271 = vpack.c.b16 %v261, %v260
    %v272 = vpack.c.b16 %v263, %v262
    %v273 = vpack.c.b16 %v265, %v264
    %282 = vmatprep.subr.bf16.mxu0 0
    %283 = vmatpush1.bf16.msra.mxu0 %v273
    %284 = vmatprep.subr.bf16.mxu0 0
    %285 = vmatpush1.bf16.msra.mxu0 %v272
    %286 = vmatprep.subr.bf16.mxu0 0
    %287 = vmatpush1.bf16.msra.mxu0 %v271
    %288 = vmatprep.subr.bf16.mxu0 0
    %289 = vmatpush1.bf16.msra.mxu0 %v270
    %290 = vmatprep.subr.bf16.mxu0 0
    %291 = vmatpush1.bf16.msra.mxu0 %v269
    %292 = vmatprep.subr.bf16.mxu0 0
    %293 = vmatpush1.bf16.msra.mxu0 %v268
    %294 = vmatprep.subr.bf16.mxu0 0
    %295 = vmatpush1.bf16.msra.mxu0 %v267
    %296 = vmatprep.subr.bf16.mxu0 0
    %297 = vmatpush1.bf16.msra.mxu0 %v266
    %298 = vmatprep.subr.bf16.mxu0 0
    %299 = vmatpush2.bf16.msra.mxu0 0
    %300 = vmatprep.subr.bf16.mxu0 0
    %301 = vmatpush2.bf16.msra.mxu0 0
    %302 = vmatprep.subr.bf16.mxu0 0
    %303 = vmatpush2.bf16.msra.mxu0 0
    %304 = vmatprep.subr.bf16.mxu0 0
    %305 = vmatpush2.bf16.msra.mxu0 0
    %306 = vmatprep.subr.bf16.mxu0 0
    %307 = vmatpush2.bf16.msra.mxu0 0
    %308 = vmatprep.subr.bf16.mxu0 0
    %309 = vmatpush2.bf16.msra.mxu0 0
    %310 = vmatprep.subr.bf16.mxu0 0
    %311 = vmatpush2.bf16.msra.mxu0 0
    %312 = vmatprep.subr.bf16.mxu0 0
    %313 = vmatpush2.bf16.msra.mxu0 0
    %314 = vmatprep.mubr.bf16.mxu0 0
    %315 = vmatmul.mubr.bf16.gmra.mxu0 %v210
    %v316 = vpop.f32.mrf.mxu0
    %v317 = vadd.f32 %v232, %v316
    %v318 = vpop.f32.mrf.mxu0
    %v319 = vpop.f32.mrf.mxu0
    %v320 = vadd.f32 %v232, %v319
    %v321 = vpop.f32.mrf.mxu0
    %322 = vdwg.mxu0
    %v323 = vtanh.pop %v317
    %v324 = vtanh.pop %v320
    %v325 = vpack.c.bf16 %v324, %v323
    %v326 = vld [vmem:[#allocation8] sm:$0xf]
    %v327 = vld [vmem:[#allocation8 + $0x4] sm:$0xf]
    %v328 = vld [vmem:[#allocation8 + $0x8] sm:$0xf]
    %v329 = vld [vmem:[#allocation8 + $0xc] sm:$0xf]
    %v330 = vld [vmem:[#allocation8 + $0x10] sm:$0xf]
    %v331 = vld [vmem:[#allocation8 + $0x14] sm:$0xf]
    %v332 = vld [vmem:[#allocation8 + $0x18] sm:$0xf]
    %v333 = vld [vmem:[#allocation8 + $0x1c] sm:$0xf]
    %v334 = vld [vmem:[#allocation8 + $0x20] sm:$0xf]
    %v335 = vld [vmem:[#allocation8 + $0x24] sm:$0xf]
    %v336 = vld [vmem:[#allocation8 + $0x28] sm:$0xf]
    %v337 = vld [vmem:[#allocation8 + $0x2c] sm:$0xf]
    %v338 = vld [vmem:[#allocation8 + $0x30] sm:$0xf]
    %v339 = vld [vmem:[#allocation8 + $0x34] sm:$0xf]
    %v340 = vld [vmem:[#allocation8 + $0x38] sm:$0xf]
    %v341 = vld [vmem:[#allocation8 + $0x3c] sm:$0xf]
    %v342 = vld [vmem:[%s6] sm:$0x1]
    %v344 = vlaneseq
    %v345 = vshrl.u32 %v344, 7
    %v346 = vsub.s32 0, %v345
    %v347 = vrot.slane %v342, %v346
    %v365 = vunpack.c.l.b16 %v326
    %v366 = vunpack.c.l.b16 %v327
    %v367 = vunpack.c.l.b16 %v328
    %v368 = vunpack.c.l.b16 %v329
    %v369 = vunpack.c.l.b16 %v330
    %v370 = vunpack.c.l.b16 %v331
    %v371 = vunpack.c.l.b16 %v332
    %v372 = vunpack.c.l.b16 %v333
    %v373 = vunpack.c.l.b16 %v334
    %v374 = vunpack.c.l.b16 %v335
    %v375 = vunpack.c.l.b16 %v336
    %v376 = vunpack.c.l.b16 %v337
    %v377 = vunpack.c.l.b16 %v338
    %v378 = vunpack.c.l.b16 %v339
    %v379 = vunpack.c.l.b16 %v340
    %v380 = vunpack.c.l.b16 %v341
    %v381 = vpack.c.b16 %v366, %v365
    %v382 = vpack.c.b16 %v368, %v367
    %v383 = vpack.c.b16 %v370, %v369
    %v384 = vpack.c.b16 %v372, %v371
    %v385 = vpack.c.b16 %v374, %v373
    %v386 = vpack.c.b16 %v376, %v375
    %v387 = vpack.c.b16 %v378, %v377
    %v388 = vpack.c.b16 %v380, %v379
    %397 = vmatprep.subr.bf16.mxu0 0
    %398 = vmatpush1.bf16.msra.mxu0 %v388
    %399 = vmatprep.subr.bf16.mxu0 0
    %400 = vmatpush1.bf16.msra.mxu0 %v387
    %401 = vmatprep.subr.bf16.mxu0 0
    %402 = vmatpush1.bf16.msra.mxu0 %v386
    %403 = vmatprep.subr.bf16.mxu0 0
    %404 = vmatpush1.bf16.msra.mxu0 %v385
    %405 = vmatprep.subr.bf16.mxu0 0
    %406 = vmatpush1.bf16.msra.mxu0 %v384
    %407 = vmatprep.subr.bf16.mxu0 0
    %408 = vmatpush1.bf16.msra.mxu0 %v383
    %409 = vmatprep.subr.bf16.mxu0 0
    %410 = vmatpush1.bf16.msra.mxu0 %v382
    %411 = vmatprep.subr.bf16.mxu0 0
    %412 = vmatpush1.bf16.msra.mxu0 %v381
    %413 = vmatprep.subr.bf16.mxu0 0
    %414 = vmatpush2.bf16.msra.mxu0 0
    %415 = vmatprep.subr.bf16.mxu0 0
    %416 = vmatpush2.bf16.msra.mxu0 0
    %417 = vmatprep.subr.bf16.mxu0 0
    %418 = vmatpush2.bf16.msra.mxu0 0
    %419 = vmatprep.subr.bf16.mxu0 0
    %420 = vmatpush2.bf16.msra.mxu0 0
    %421 = vmatprep.subr.bf16.mxu0 0
    %422 = vmatpush2.bf16.msra.mxu0 0
    %423 = vmatprep.subr.bf16.mxu0 0
    %424 = vmatpush2.bf16.msra.mxu0 0
    %425 = vmatprep.subr.bf16.mxu0 0
    %426 = vmatpush2.bf16.msra.mxu0 0
    %427 = vmatprep.subr.bf16.mxu0 0
    %428 = vmatpush2.bf16.msra.mxu0 0
    %429 = vmatprep.mubr.bf16.mxu0 0
    %430 = vmatmul.mubr.bf16.gmra.mxu0 %v325
    %v431 = vpop.f32.mrf.mxu0
    %v432 = vadd.f32 %v347, %v431
    %v433 = vpop.f32.mrf.mxu0
    %v434 = vpop.f32.mrf.mxu0
    %v435 = vadd.f32 %v347, %v434
    %v436 = vpop.f32.mrf.mxu0
    %437 = vdwg.mxu0
    %v438 = vtanh.pop %v432
    %v439 = vtanh.pop %v435
    %v440 = vpack.c.bf16 %v439, %v438
    %v441 = vld [vmem:[#allocation10] sm:$0xf]
    %v442 = vld [vmem:[#allocation10 + $0x4] sm:$0xf]
    %v443 = vld [vmem:[#allocation10 + $0x8] sm:$0xf]
    %v444 = vld [vmem:[#allocation10 + $0xc] sm:$0xf]
    %v445 = vld [vmem:[#allocation10 + $0x10] sm:$0xf]
    %v446 = vld [vmem:[#allocation10 + $0x14] sm:$0xf]
    %v447 = vld [vmem:[#allocation10 + $0x18] sm:$0xf]
    %v448 = vld [vmem:[#allocation10 + $0x1c] sm:$0xf]
    %v449 = vld [vmem:[#allocation10 + $0x20] sm:$0xf]
    %v450 = vld [vmem:[#allocation10 + $0x24] sm:$0xf]
    %v451 = vld [vmem:[#allocation10 + $0x28] sm:$0xf]
    %v452 = vld [vmem:[#allocation10 + $0x2c] sm:$0xf]
    %v453 = vld [vmem:[#allocation10 + $0x30] sm:$0xf]
    %v454 = vld [vmem:[#allocation10 + $0x34] sm:$0xf]
    %v455 = vld [vmem:[#allocation10 + $0x38] sm:$0xf]
    %v456 = vld [vmem:[#allocation10 + $0x3c] sm:$0xf]
    %v457 = vld [vmem:[%s8] sm:$0x1]
    %v459 = vlaneseq
    %v460 = vshrl.u32 %v459, 7
    %v461 = vsub.s32 0, %v460
    %v462 = vrot.slane %v457, %v461
    %v480 = vunpack.c.l.b16 %v441
    %v481 = vunpack.c.l.b16 %v442
    %v482 = vunpack.c.l.b16 %v443
    %v483 = vunpack.c.l.b16 %v444
    %v484 = vunpack.c.l.b16 %v445
    %v485 = vunpack.c.l.b16 %v446
    %v486 = vunpack.c.l.b16 %v447
    %v487 = vunpack.c.l.b16 %v448
    %v488 = vunpack.c.l.b16 %v449
    %v489 = vunpack.c.l.b16 %v450
    %v490 = vunpack.c.l.b16 %v451
    %v491 = vunpack.c.l.b16 %v452
    %v492 = vunpack.c.l.b16 %v453
    %v493 = vunpack.c.l.b16 %v454
    %v494 = vunpack.c.l.b16 %v455
    %v495 = vunpack.c.l.b16 %v456
    %v496 = vpack.c.b16 %v481, %v480
    %v497 = vpack.c.b16 %v483, %v482
    %v498 = vpack.c.b16 %v485, %v484
    %v499 = vpack.c.b16 %v487, %v486
    %v500 = vpack.c.b16 %v489, %v488
    %v501 = vpack.c.b16 %v491, %v490
    %v502 = vpack.c.b16 %v493, %v492
    %v503 = vpack.c.b16 %v495, %v494
    %512 = vmatprep.subr.bf16.mxu0 0
    %513 = vmatpush1.bf16.msra.mxu0 %v503
    %514 = vmatprep.subr.bf16.mxu0 0
    %515 = vmatpush1.bf16.msra.mxu0 %v502
    %516 = vmatprep.subr.bf16.mxu0 0
    %517 = vmatpush1.bf16.msra.mxu0 %v501
    %518 = vmatprep.subr.bf16.mxu0 0
    %519 = vmatpush1.bf16.msra.mxu0 %v500
    %520 = vmatprep.subr.bf16.mxu0 0
    %521 = vmatpush1.bf16.msra.mxu0 %v499
    %522 = vmatprep.subr.bf16.mxu0 0
    %523 = vmatpush1.bf16.msra.mxu0 %v498
    %524 = vmatprep.subr.bf16.mxu0 0
    %525 = vmatpush1.bf16.msra.mxu0 %v497
    %526 = vmatprep.subr.bf16.mxu0 0
    %527 = vmatpush1.bf16.msra.mxu0 %v496
    %528 = vmatprep.subr.bf16.mxu0 0
    %529 = vmatpush2.bf16.msra.mxu0 0
    %530 = vmatprep.subr.bf16.mxu0 0
    %531 = vmatpush2.bf16.msra.mxu0 0
    %532 = vmatprep.subr.bf16.mxu0 0
    %533 = vmatpush2.bf16.msra.mxu0 0
    %534 = vmatprep.subr.bf16.mxu0 0
    %535 = vmatpush2.bf16.msra.mxu0 0
    %536 = vmatprep.subr.bf16.mxu0 0
    %537 = vmatpush2.bf16.msra.mxu0 0
    %538 = vmatprep.subr.bf16.mxu0 0
    %539 = vmatpush2.bf16.msra.mxu0 0
    %540 = vmatprep.subr.bf16.mxu0 0
    %541 = vmatpush2.bf16.msra.mxu0 0
    %542 = vmatprep.subr.bf16.mxu0 0
    %543 = vmatpush2.bf16.msra.mxu0 0
    %544 = vmatprep.mubr.bf16.mxu0 0
    %545 = vmatmul.mubr.bf16.gmra.mxu0 %v440
    %v546 = vpop.f32.mrf.mxu0
    %v547 = vadd.f32 %v462, %v546
    %v548 = vpop.f32.mrf.mxu0
    %v549 = vpop.f32.mrf.mxu0
    %v550 = vadd.f32 %v462, %v549
    %v551 = vpop.f32.mrf.mxu0
    %552 = vdwg.mxu0
    %v553 = vtanh.pop %v547
    %v554 = vtanh.pop %v550
    %v555 = vpack.c.bf16 %v554, %v553
    %v556 = vld [vmem:[#allocation11] sm:$0xf]
    %v557 = vld [vmem:[#allocation11 + $0x4] sm:$0xf]
    %v558 = vld [vmem:[#allocation11 + $0x8] sm:$0xf]
    %v559 = vld [vmem:[#allocation11 + $0xc] sm:$0xf]
    %v560 = vld [vmem:[#allocation11 + $0x10] sm:$0xf]
    %v561 = vld [vmem:[#allocation11 + $0x14] sm:$0xf]
    %v562 = vld [vmem:[#allocation11 + $0x18] sm:$0xf]
    %v563 = vld [vmem:[#allocation11 + $0x1c] sm:$0xf]
    %v564 = vld [vmem:[#allocation11 + $0x20] sm:$0xf]
    %v565 = vld [vmem:[#allocation11 + $0x24] sm:$0xf]
    %v566 = vld [vmem:[#allocation11 + $0x28] sm:$0xf]
    %v567 = vld [vmem:[#allocation11 + $0x2c] sm:$0xf]
    %v568 = vld [vmem:[#allocation11 + $0x30] sm:$0xf]
    %v569 = vld [vmem:[#allocation11 + $0x34] sm:$0xf]
    %v570 = vld [vmem:[#allocation11 + $0x38] sm:$0xf]
    %v571 = vld [vmem:[#allocation11 + $0x3c] sm:$0xf]
    %v572 = vld [vmem:[%s10] sm:$0x1]
    %v574 = vlaneseq
    %v575 = vshrl.u32 %v574, 7
    %v576 = vsub.s32 0, %v575
    %v577 = vrot.slane %v572, %v576
    %v595 = vunpack.c.l.b16 %v556
    %v596 = vunpack.c.l.b16 %v557
    %v597 = vunpack.c.l.b16 %v558
    %v598 = vunpack.c.l.b16 %v559
    %v599 = vunpack.c.l.b16 %v560
    %v600 = vunpack.c.l.b16 %v561
    %v601 = vunpack.c.l.b16 %v562
    %v602 = vunpack.c.l.b16 %v563
    %v603 = vunpack.c.l.b16 %v564
    %v604 = vunpack.c.l.b16 %v565
    %v605 = vunpack.c.l.b16 %v566
    %v606 = vunpack.c.l.b16 %v567
    %v607 = vunpack.c.l.b16 %v568
    %v608 = vunpack.c.l.b16 %v569
    %v609 = vunpack.c.l.b16 %v570
    %v610 = vunpack.c.l.b16 %v571
    %v611 = vpack.c.b16 %v596, %v595
    %v612 = vpack.c.b16 %v598, %v597
    %v613 = vpack.c.b16 %v600, %v599
    %v614 = vpack.c.b16 %v602, %v601
    %v615 = vpack.c.b16 %v604, %v603
    %v616 = vpack.c.b16 %v606, %v605
    %v617 = vpack.c.b16 %v608, %v607
    %v618 = vpack.c.b16 %v610, %v609
    %627 = vmatprep.subr.bf16.mxu0 0
    %628 = vmatpush1.bf16.msra.mxu0 %v618
    %629 = vmatprep.subr.bf16.mxu0 0
    %630 = vmatpush1.bf16.msra.mxu0 %v617
    %631 = vmatprep.subr.bf16.mxu0 0
    %632 = vmatpush1.bf16.msra.mxu0 %v616
    %633 = vmatprep.subr.bf16.mxu0 0
    %634 = vmatpush1.bf16.msra.mxu0 %v615
    %635 = vmatprep.subr.bf16.mxu0 0
    %636 = vmatpush1.bf16.msra.mxu0 %v614
    %637 = vmatprep.subr.bf16.mxu0 0
    %638 = vmatpush1.bf16.msra.mxu0 %v613
    %639 = vmatprep.subr.bf16.mxu0 0
    %640 = vmatpush1.bf16.msra.mxu0 %v612
    %641 = vmatprep.subr.bf16.mxu0 0
    %642 = vmatpush1.bf16.msra.mxu0 %v611
    %643 = vmatprep.subr.bf16.mxu0 0
    %644 = vmatpush2.bf16.msra.mxu0 0
    %645 = vmatprep.subr.bf16.mxu0 0
    %646 = vmatpush2.bf16.msra.mxu0 0
    %647 = vmatprep.subr.bf16.mxu0 0
    %648 = vmatpush2.bf16.msra.mxu0 0
    %649 = vmatprep.subr.bf16.mxu0 0
    %650 = vmatpush2.bf16.msra.mxu0 0
    %651 = vmatprep.subr.bf16.mxu0 0
    %652 = vmatpush2.bf16.msra.mxu0 0
    %653 = vmatprep.subr.bf16.mxu0 0
    %654 = vmatpush2.bf16.msra.mxu0 0
    %655 = vmatprep.subr.bf16.mxu0 0
    %656 = vmatpush2.bf16.msra.mxu0 0
    %657 = vmatprep.subr.bf16.mxu0 0
    %658 = vmatpush2.bf16.msra.mxu0 0
    %659 = vmatprep.mubr.bf16.mxu0 0
    %660 = vmatmul.mubr.bf16.gmra.mxu0 %v555
    %v661 = vpop.f32.mrf.mxu0
    %v662 = vadd.f32 %v577, %v661
    %v663 = vpop.f32.mrf.mxu0
    %v664 = vpop.f32.mrf.mxu0
    %v665 = vadd.f32 %v577, %v664
    %v666 = vpop.f32.mrf.mxu0
    %667 = vdwg.mxu0
    %v668 = vtanh.pop %v662
    %v669 = vtanh.pop %v665
    %v670 = vpack.c.bf16 %v669, %v668
    %v671 = vld [vmem:[#allocation13] sm:$0xf]
    %v672 = vld [vmem:[#allocation13 + $0x4] sm:$0xf]
    %v673 = vld [vmem:[#allocation13 + $0x8] sm:$0xf]
    %v674 = vld [vmem:[#allocation13 + $0xc] sm:$0xf]
    %v675 = vld [vmem:[#allocation13 + $0x10] sm:$0xf]
    %v676 = vld [vmem:[#allocation13 + $0x14] sm:$0xf]
    %v677 = vld [vmem:[#allocation13 + $0x18] sm:$0xf]
    %v678 = vld [vmem:[#allocation13 + $0x1c] sm:$0xf]
    %v679 = vld [vmem:[#allocation13 + $0x20] sm:$0xf]
    %v680 = vld [vmem:[#allocation13 + $0x24] sm:$0xf]
    %v681 = vld [vmem:[#allocation13 + $0x28] sm:$0xf]
    %v682 = vld [vmem:[#allocation13 + $0x2c] sm:$0xf]
    %v683 = vld [vmem:[#allocation13 + $0x30] sm:$0xf]
    %v684 = vld [vmem:[#allocation13 + $0x34] sm:$0xf]
    %v685 = vld [vmem:[#allocation13 + $0x38] sm:$0xf]
    %v686 = vld [vmem:[#allocation13 + $0x3c] sm:$0xf]
    %v687 = vld [vmem:[%s12] sm:$0x1]
    %v689 = vlaneseq
    %v690 = vshrl.u32 %v689, 7
    %v691 = vsub.s32 0, %v690
    %v692 = vrot.slane %v687, %v691
    %v710 = vunpack.c.l.b16 %v671
    %v711 = vunpack.c.l.b16 %v672
    %v712 = vunpack.c.l.b16 %v673
    %v713 = vunpack.c.l.b16 %v674
    %v714 = vunpack.c.l.b16 %v675
    %v715 = vunpack.c.l.b16 %v676
    %v716 = vunpack.c.l.b16 %v677
    %v717 = vunpack.c.l.b16 %v678
    %v718 = vunpack.c.l.b16 %v679
    %v719 = vunpack.c.l.b16 %v680
    %v720 = vunpack.c.l.b16 %v681
    %v721 = vunpack.c.l.b16 %v682
    %v722 = vunpack.c.l.b16 %v683
    %v723 = vunpack.c.l.b16 %v684
    %v724 = vunpack.c.l.b16 %v685
    %v725 = vunpack.c.l.b16 %v686
    %v726 = vpack.c.b16 %v711, %v710
    %v727 = vpack.c.b16 %v713, %v712
    %v728 = vpack.c.b16 %v715, %v714
    %v729 = vpack.c.b16 %v717, %v716
    %v730 = vpack.c.b16 %v719, %v718
    %v731 = vpack.c.b16 %v721, %v720
    %v732 = vpack.c.b16 %v723, %v722
    %v733 = vpack.c.b16 %v725, %v724
    %742 = vmatprep.subr.bf16.mxu0 0
    %743 = vmatpush1.bf16.msra.mxu0 %v733
    %744 = vmatprep.subr.bf16.mxu0 0
    %745 = vmatpush1.bf16.msra.mxu0 %v732
    %746 = vmatprep.subr.bf16.mxu0 0
    %747 = vmatpush1.bf16.msra.mxu0 %v731
    %748 = vmatprep.subr.bf16.mxu0 0
    %749 = vmatpush1.bf16.msra.mxu0 %v730
    %750 = vmatprep.subr.bf16.mxu0 0
    %751 = vmatpush1.bf16.msra.mxu0 %v729
    %752 = vmatprep.subr.bf16.mxu0 0
    %753 = vmatpush1.bf16.msra.mxu0 %v728
    %754 = vmatprep.subr.bf16.mxu0 0
    %755 = vmatpush1.bf16.msra.mxu0 %v727
    %756 = vmatprep.subr.bf16.mxu0 0
    %757 = vmatpush1.bf16.msra.mxu0 %v726
    %758 = vmatprep.subr.bf16.mxu0 0
    %759 = vmatpush2.bf16.msra.mxu0 0
    %760 = vmatprep.subr.bf16.mxu0 0
    %761 = vmatpush2.bf16.msra.mxu0 0
    %762 = vmatprep.subr.bf16.mxu0 0
    %763 = vmatpush2.bf16.msra.mxu0 0
    %764 = vmatprep.subr.bf16.mxu0 0
    %765 = vmatpush2.bf16.msra.mxu0 0
    %766 = vmatprep.subr.bf16.mxu0 0
    %767 = vmatpush2.bf16.msra.mxu0 0
    %768 = vmatprep.subr.bf16.mxu0 0
    %769 = vmatpush2.bf16.msra.mxu0 0
    %770 = vmatprep.subr.bf16.mxu0 0
    %771 = vmatpush2.bf16.msra.mxu0 0
    %772 = vmatprep.subr.bf16.mxu0 0
    %773 = vmatpush2.bf16.msra.mxu0 0
    %774 = vmatprep.mubr.bf16.mxu0 0
    %775 = vmatmul.mubr.bf16.gmra.mxu0 %v670
    %v776 = vpop.f32.mrf.mxu0
    %v777 = vadd.f32 %v692, %v776
    %v778 = vpop.f32.mrf.mxu0
    %v779 = vpop.f32.mrf.mxu0
    %v780 = vadd.f32 %v692, %v779
    %v781 = vpop.f32.mrf.mxu0
    %782 = vdwg.mxu0
    %v783 = vmul.f32 %v777, 0.5
    %v784 = vmul.f32 %v780, 0.5
    %v785 = vtanh.pop %v783
    %v786 = vtanh.pop %v784
    %v787 = vmul.f32 %v785, 0.5
    %v788 = vmul.f32 %v786, 0.5
    %v789 = vadd.f32 %v787, 0.5
    %v790 = vadd.f32 %v788, 0.5
    %791 = vst [vmem:[#allocation14] sm:$0xff] %v789
    %792 = vst [vmem:[#allocation14 + $0x8] sm:$0xff] %v790
    // Predicated region
    $region82: #{tpu_custom_call.1} parent=1 // pred_check
      _
    $region83: #{tpu_custom_call.1} parent=1 // pred_check_branch
      %794 = sbr.rel (0) target = $region85
    $region84: #{tpu_custom_call.1} parent=1 // pred_region
      %s796 = ssub.s32 256, 256
      %797 = vsyncadd [#allocation4], %s796
      %s798 = sshll.u32 [#allocation14], 4
      %s799 = int_to_ptr.vmem [resolvable:$true] %s798
      %804 = dma.vmem_to_hbm [thread:$0]  %s799, 256, %s13, [#allocation4], 128, 128, 8
    $region85: #{tpu_custom_call.1} parent=1 // pred_fallthru
      _
    // Predicated region
    $region86: #{tpu_custom_call.1} parent=1 // pred_check
      _
    $region87: #{tpu_custom_call.1} parent=1 // pred_check_branch
      %806 = sbr.rel (0) target = $region89
    $region88: #{tpu_custom_call.1} parent=1 // pred_region
      %807 = dma.done [#allocation4], 256
    $region89: #{tpu_custom_call.1} parent=1 // pred_fallthru
      _
    %808 = vsyncpa [#allocation3], 1
    %809 = vsyncpa [#allocation6], 1
    %810 = vsyncpa [#allocation9], 1
    %811 = vsyncpa [#allocation12], 1
    %812 = vsyncpa [#allocation4], 1

</llo_original>
